<compile_context>
chip_gen: v6e
topology: v6e:2x2x1
jax: 0.10.0
libtpu: 0.0.40
codegen_flags: <defaults>
</compile_context>

<pallas_src>
import functools
import math

import jax
import jax.numpy as jnp
from jax.experimental import pallas as pl
from jax.experimental.pallas import tpu as pltpu


def _round_up(x, m):
    return ((x + m - 1) // m) * m


def _phase_conv_kernel(xs_ref, w_ref, o_ref, *, stride, phase_off, phase_cnt,
                       n_groups, Ig, Og, K):
    """One (batch, time-tile) grid step.

    xs_ref: (n_groups*K*Ig, TQ)  pre-shifted, phase-sorted tap stack; time on lanes.
    w_ref : (n_groups, Og, K*Ig) per-group weights, taps in the same sorted order.
    o_ref : (stride, Cout, TQ)   phase-major output, time on lanes.
    """
    tq = o_ref.shape[-1]
    for r in range(stride):                       # static, small
        off = phase_off[r]
        cnt = phase_cnt[r]
        for g in range(n_groups):                 # static (2 groups)
            osl = slice(g * Og, (g + 1) * Og)
            if cnt == 0:
                # phase with no contributing taps -> zeros
                o_ref[r, osl, :] = jnp.zeros((Og, tq), o_ref.dtype)
                continue
            row0 = g * K * Ig + off * Ig
            xslab = xs_ref[row0:row0 + cnt * Ig, :]            # (cnt*Ig, TQ)
            wslab = w_ref[g, :, off * Ig:(off + cnt) * Ig]     # (Og, cnt*Ig)
            o_ref[r, osl, :] = jnp.dot(
                wslab, xslab, preferred_element_type=jnp.float32
            ).astype(o_ref.dtype)


def complex_transposed_conv1d(x, A, B, *, stride, padding, output_padding,
                              dilation, out_channels, time_tile=512):
    """x: (N, Cin, T) float32.  A, B: (Cin, Cout//2, K)."""
    N, Cin, T = x.shape
    Cout = out_channels
    K = A.shape[-1]
    n_groups = 2
    Ig, Og = Cin // n_groups, Cout // n_groups

    # --- module-exact weight combination (conv_transpose is linear in the
    # weight, so real_part + idea_part == conv_transpose(x, A + weight_B)).
    # NOTE: the module slices B's first (Cin) axis with spl = Cout // 2.
    spl = Cout // 2
    weight_B = jnp.concatenate([-B[:spl], B[spl:]], axis=0)
    W = A + weight_B                                   # (Cin, Og, K), groups=2

    # --- module's reflect padding of the input
    if padding:
        assert padding <= T - 1, "reflect pad needs padding <= T-1"
        x = jnp.pad(x, ((0, 0), (0, 0), (padding, padding)), mode="reflect")
    Tp = x.shape[-1]
    T_conv = (Tp - 1) * stride + dilation * (K - 1) + 1

    # --- polyphase bookkeeping: tap k hits output phase p_k with shift q_k
    p_k = [(k * dilation) % stride for k in range(K)]
    q_k = [(k * dilation) // stride for k in range(K)]
    order = sorted(range(K), key=lambda k: (p_k[k], k))   # taps grouped by phase
    phase_off, phase_cnt = [], []
    pos = 0
    for r in range(stride):
        cnt = sum(1 for k in order if p_k[k] == r)
        phase_off.append(pos)
        phase_cnt.append(cnt)
        pos += cnt

    # --- per-phase output length in the q domain, padded to the time tile
    Q_max = -(-T_conv // stride)                       # ceil(T_conv / stride)
    tile_q = min(time_tile, _round_up(Q_max, 128))
    # TODO(synk): on v7x (64 MiB VMEM, 2 TCs) halve time_tile for very large channel counts.
    Q_pad = _round_up(Q_max, tile_q)

    # --- pre-shifted, phase-sorted tap stack (no zero-upsample, no transpose):
    #   xs[n, g*K*Ig + sk*Ig + i, q] = x[n, g*Ig + i, q - q_{order[sk]}]  (0 if OOB)
    pad_left = max(q_k)
    pad_right = max(0, Q_pad - Tp)
    xz = jnp.pad(x, ((0, 0), (0, 0), (pad_left, pad_right)))
    shifted = [xz[:, :, pad_left - q_k[k]: pad_left - q_k[k] + Q_pad]
               for k in range(K)]                      # each (N, Cin, Q_pad)
    rows = []
    for g in range(n_groups):
        for k in order:
            rows.append(shifted[k][:, g * Ig:(g + 1) * Ig, :])
    xs = jnp.concatenate(rows, axis=1)                 # (N, n_groups*K*Ig, Q_pad)

    # --- per-group weights in the same phase-sorted tap order: (2, Og, K*Ig)
    order_idx = jnp.asarray(order, jnp.int32)
    wgs = []
    for g in range(n_groups):
        Wg = W[g * Ig:(g + 1) * Ig][:, :, order_idx]   # (Ig, Og, K)
        wgs.append(jnp.transpose(Wg, (1, 2, 0)).reshape(Og, K * Ig))
    wk = jnp.stack(wgs, axis=0)                        # (2, Og, K*Ig)

    KC = n_groups * K * Ig
    kern = functools.partial(
        _phase_conv_kernel, stride=stride, phase_off=tuple(phase_off),
        phase_cnt=tuple(phase_cnt), n_groups=n_groups, Ig=Ig, Og=Og, K=K)

    out_ph = pl.pallas_call(
        kern,
        out_shape=jax.ShapeDtypeStruct((N, stride, Cout, Q_pad), x.dtype),
        grid_spec=pltpu.PrefetchScalarGridSpec(
            num_scalar_prefetch=0,
            grid=(N, Q_pad // tile_q),
            in_specs=[
                pl.BlockSpec((None, KC, tile_q), lambda n, t: (n, 0, t)),
                pl.BlockSpec((n_groups, Og, K * Ig), lambda n, t: (0, 0, 0)),
            ],
            out_specs=pl.BlockSpec((None, stride, Cout, tile_q),
                                   lambda n, t: (n, 0, 0, t)),
        ),
        compiler_params=pltpu.CompilerParams(
            dimension_semantics=("parallel", "parallel"),
            vmem_limit_bytes=64 * 1024 * 1024),
    )(xs, wk)

    # --- interleave phases back:  out[n, o, q*stride + r] = out_ph[n, r, o, q]
    out = jnp.transpose(out_ph, (0, 2, 3, 1)).reshape(N, Cout, Q_pad * stride)
    out = out[:, :, :T_conv]

    if output_padding:
        # module applies reflect padding on BOTH sides (not standard
        # ConvTranspose1d output_padding) -- keep module semantics.
        out = jnp.pad(out, ((0, 0), (0, 0), (output_padding, output_padding)),
                      mode="reflect")
    return out


def reference_forward(x, A, B, *, stride, padding, output_padding, dilation,
                      out_channels):
    """Pure-JAX reference implementing the module (F.conv_transpose1d, groups=2)."""
    N, Cin, T = x.shape
    Cout = out_channels
    K = A.shape[-1]
    spl = Cout // 2
    weight_B = jnp.concatenate([-B[:spl], B[spl:]], axis=0)
    W = A + weight_B                                   # (Cin, Cout//2, K)

    xp = jnp.pad(x, ((0, 0), (0, 0), (padding, padding)), mode="reflect") if padding else x
    Tp = xp.shape[-1]
    T_conv = (Tp - 1) * stride + dilation * (K - 1) + 1
    Ig, Og = Cin // 2, Cout // 2
    out = jnp.zeros((N, Cout, T_conv), x.dtype)
    for g in range(2):
        for k in range(K):
            contrib = jnp.einsum("nis,io->nos",
                                 xp[:, g * Ig:(g + 1) * Ig, :],
                                 W[g * Ig:(g + 1) * Ig, :, k])
            start = k * dilation
            stop = start + (Tp - 1) * stride + 1
            out = out.at[:, g * Og:(g + 1) * Og, start:stop:stride].add(contrib)
    if output_padding:
        out = jnp.pad(out, ((0, 0), (0, 0), (output_padding, output_padding)),
                      mode="reflect")
    return out


if __name__ == "__main__":
    # Small shapes consistent with the module: x is (N, C, T), C = real||imag halves.
    N, Cin, Cout, K, T = 2, 4, 4, 3, 16
    stride, padding, output_padding, dilation = 2, 1, 1, 1

    key = jax.random.PRNGKey(0)
    k1, k2, k3 = jax.random.split(key, 3)

    # Deterministic init mirroring _ComplexConvNd.reset_parameters
    fan_in = (Cout // 2) * K
    gain = math.sqrt(2.0)                 # calculate_gain('leaky_relu', 0)
    bound = math.sqrt(3.0) * gain / math.sqrt(fan_in)
    A = jax.random.uniform(k1, (Cin, Cout // 2, K), jnp.float32,
                           -bound / math.pi ** 2, bound / math.pi ** 2)
    B = jax.random.uniform(k2, (Cin, Cout // 2, K), jnp.float32,
                           -1.0 / math.pi, 1.0 / math.pi)
    x = jax.random.normal(k3, (N, Cin, T), jnp.float32)

    out = complex_transposed_conv1d(x, A, B, stride=stride, padding=padding,
                                    output_padding=output_padding,
                                    dilation=dilation, out_channels=Cout)
    out = jax.block_until_ready(out)

    ref = reference_forward(x, A, B, stride=stride, padding=padding,
                            output_padding=output_padding,
                            dilation=dilation, out_channels=Cout)
    assert out.shape == ref.shape, (out.shape, ref.shape)
    assert jnp.allclose(out, ref, atol=1e-5, rtol=1e-5), \
        f"max abs err = {jnp.max(jnp.abs(out - ref))}"
    print("KERNEL_OK")
</pallas_src>

<mosaic_0001>
module attributes {stable_mosaic.version = 11 : i64} {
  func.func @_phase_conv_kernel(%arg0: i32, %arg1: i32, %arg2: memref<1x12x128xf32, #tpu.memory_space<vmem>>, %arg3: memref<2x2x6xf32, #tpu.memory_space<vmem>>, %arg4: memref<1x2x4x128xf32, #tpu.memory_space<vmem>>) attributes {dimension_semantics = [#tpu.dimension_semantics<parallel>, #tpu.dimension_semantics<parallel>], iteration_bounds = array<i64: 2, 1>, scalar_prefetch = 0 : i64, scratch_operands = 0 : i64, tpu.core_type = #tpu.core_type<tc>, window_params = [{transform_indices = @transform_0, window_bounds = array<i64: 1, 12, 128>}, {pipeline_mode = #tpu.pipeline_mode<synchronous>, transform_indices = @transform_1, window_bounds = array<i64: 2, 2, 6>}, {transform_indices = @transform_2, window_bounds = array<i64: 1, 2, 4, 128>}]} {
    %c0 = arith.constant 0 : index
    %c0_0 = arith.constant 0 : index
    %c0_1 = arith.constant 0 : index
    %0 = vector.load %arg2[%c0, %c0_0, %c0_1] : memref<1x12x128xf32, #tpu.memory_space<vmem>>, vector<1x4x128xf32>
    %1 = vector.shape_cast %0 : vector<1x4x128xf32> to vector<4x128xf32>
    %c0_2 = arith.constant 0 : index
    %c0_3 = arith.constant 0 : index
    %c0_4 = arith.constant 0 : index
    %2 = vector.load %arg3[%c0_2, %c0_3, %c0_4] : memref<2x2x6xf32, #tpu.memory_space<vmem>>, vector<1x2x4xf32>
    %3 = vector.shape_cast %2 : vector<1x2x4xf32> to vector<2x4xf32>
    %cst = arith.constant dense<0.000000e+00> : vector<2x128xf32>
    %4 = tpu.matmul %3, %1, %cst {dimension_numbers = #tpu.dot_dimension_numbers<[1], [0], [0], [1], [0, 0, 1, 1], [], []>} : vector<2x4xf32>, vector<4x128xf32>, vector<2x128xf32> -> vector<2x128xf32>
    %c0_5 = arith.constant 0 : index
    %c0_6 = arith.constant 0 : index
    %c0_7 = arith.constant 0 : index
    %c0_8 = arith.constant 0 : index
    %5 = vector.load %arg4[%c0_5, %c0_6, %c0_7, %c0_8] : memref<1x2x4x128xf32, #tpu.memory_space<vmem>>, vector<1x1x2x128xf32>
    %6 = vector.shape_cast %5 : vector<1x1x2x128xf32> to vector<2x128xf32>
    %7 = vector.shape_cast %4 : vector<2x128xf32> to vector<1x1x2x128xf32>
    tpu.vector_store %arg4[%c0_5, %c0_6, %c0_7, %c0_8], %7 {strides = array<i32>} : memref<1x2x4x128xf32, #tpu.memory_space<vmem>>, vector<1x1x2x128xf32>,
    %c0_9 = arith.constant 0 : index
    %c6 = arith.constant 6 : index
    %c0_10 = arith.constant 0 : index
    %8 = vector.load %arg2[%c0_9, %c6, %c0_10] : memref<1x12x128xf32, #tpu.memory_space<vmem>>, vector<1x4x128xf32>
    %9 = vector.shape_cast %8 : vector<1x4x128xf32> to vector<4x128xf32>
    %c1 = arith.constant 1 : index
    %c0_11 = arith.constant 0 : index
    %c0_12 = arith.constant 0 : index
    %10 = vector.load %arg3[%c1, %c0_11, %c0_12] : memref<2x2x6xf32, #tpu.memory_space<vmem>>, vector<1x2x4xf32>
    %11 = vector.shape_cast %10 : vector<1x2x4xf32> to vector<2x4xf32>
    %cst_13 = arith.constant dense<0.000000e+00> : vector<2x128xf32>
    %12 = tpu.matmul %11, %9, %cst_13 {dimension_numbers = #tpu.dot_dimension_numbers<[1], [0], [0], [1], [0, 0, 1, 1], [], []>} : vector<2x4xf32>, vector<4x128xf32>, vector<2x128xf32> -> vector<2x128xf32>
    %c0_14 = arith.constant 0 : index
    %c0_15 = arith.constant 0 : index
    %c2 = arith.constant 2 : index
    %c0_16 = arith.constant 0 : index
    %13 = vector.load %arg4[%c0_14, %c0_15, %c2, %c0_16] : memref<1x2x4x128xf32, #tpu.memory_space<vmem>>, vector<1x1x2x128xf32>
    %14 = vector.shape_cast %13 : vector<1x1x2x128xf32> to vector<2x128xf32>
    %15 = vector.shape_cast %12 : vector<2x128xf32> to vector<1x1x2x128xf32>
    tpu.vector_store %arg4[%c0_14, %c0_15, %c2, %c0_16], %15 {strides = array<i32>} : memref<1x2x4x128xf32, #tpu.memory_space<vmem>>, vector<1x1x2x128xf32>,
    %c0_17 = arith.constant 0 : index
    %c4 = arith.constant 4 : index
    %c0_18 = arith.constant 0 : index
    %16 = vector.load %arg2[%c0_17, %c4, %c0_18] : memref<1x12x128xf32, #tpu.memory_space<vmem>>, vector<1x2x128xf32>
    %17 = vector.shape_cast %16 : vector<1x2x128xf32> to vector<2x128xf32>
    %c0_19 = arith.constant 0 : index
    %c0_20 = arith.constant 0 : index
    %c4_21 = arith.constant 4 : index
    %18 = vector.load %arg3[%c0_19, %c0_20, %c4_21] : memref<2x2x6xf32, #tpu.memory_space<vmem>>, vector<1x2x2xf32>
    %19 = vector.shape_cast %18 : vector<1x2x2xf32> to vector<2x2xf32>
    %cst_22 = arith.constant dense<0.000000e+00> : vector<2x128xf32>
    %20 = tpu.matmul %19, %17, %cst_22 {dimension_numbers = #tpu.dot_dimension_numbers<[1], [0], [0], [1], [0, 0, 1, 1], [], []>} : vector<2x2xf32>, vector<2x128xf32>, vector<2x128xf32> -> vector<2x128xf32>
    %c0_23 = arith.constant 0 : index
    %c1_24 = arith.constant 1 : index
    %c0_25 = arith.constant 0 : index
    %c0_26 = arith.constant 0 : index
    %21 = vector.load %arg4[%c0_23, %c1_24, %c0_25, %c0_26] : memref<1x2x4x128xf32, #tpu.memory_space<vmem>>, vector<1x1x2x128xf32>
    %22 = vector.shape_cast %21 : vector<1x1x2x128xf32> to vector<2x128xf32>
    %23 = vector.shape_cast %20 : vector<2x128xf32> to vector<1x1x2x128xf32>
    tpu.vector_store %arg4[%c0_23, %c1_24, %c0_25, %c0_26], %23 {strides = array<i32>} : memref<1x2x4x128xf32, #tpu.memory_space<vmem>>, vector<1x1x2x128xf32>,
    %c0_27 = arith.constant 0 : index
    %c10 = arith.constant 10 : index
    %c0_28 = arith.constant 0 : index
    %24 = vector.load %arg2[%c0_27, %c10, %c0_28] : memref<1x12x128xf32, #tpu.memory_space<vmem>>, vector<1x2x128xf32>
    %25 = vector.shape_cast %24 : vector<1x2x128xf32> to vector<2x128xf32>
    %c1_29 = arith.constant 1 : index
    %c0_30 = arith.constant 0 : index
    %c4_31 = arith.constant 4 : index
    %26 = vector.load %arg3[%c1_29, %c0_30, %c4_31] : memref<2x2x6xf32, #tpu.memory_space<vmem>>, vector<1x2x2xf32>
    %27 = vector.shape_cast %26 : vector<1x2x2xf32> to vector<2x2xf32>
    %cst_32 = arith.constant dense<0.000000e+00> : vector<2x128xf32>
    %28 = tpu.matmul %27, %25, %cst_32 {dimension_numbers = #tpu.dot_dimension_numbers<[1], [0], [0], [1], [0, 0, 1, 1], [], []>} : vector<2x2xf32>, vector<2x128xf32>, vector<2x128xf32> -> vector<2x128xf32>
    %c0_33 = arith.constant 0 : index
    %c1_34 = arith.constant 1 : index
    %c2_35 = arith.constant 2 : index
    %c0_36 = arith.constant 0 : index
    %29 = vector.load %arg4[%c0_33, %c1_34, %c2_35, %c0_36] : memref<1x2x4x128xf32, #tpu.memory_space<vmem>>, vector<1x1x2x128xf32>
    %30 = vector.shape_cast %29 : vector<1x1x2x128xf32> to vector<2x128xf32>
    %31 = vector.shape_cast %28 : vector<2x128xf32> to vector<1x1x2x128xf32>
    tpu.vector_store %arg4[%c0_33, %c1_34, %c2_35, %c0_36], %31 {strides = array<i32>} : memref<1x2x4x128xf32, #tpu.memory_space<vmem>>, vector<1x1x2x128xf32>,
    return
  }
  func.func @transform_0(%arg0: i32, %arg1: i32) -> (i32, i32, i32) {
    %c0_i32 = arith.constant 0 : i32
    %c0_i32_0 = arith.constant 0 : i32
    return %arg0, %c0_i32, %arg1 : i32, i32, i32
  }
  func.func @transform_1(%arg0: i32, %arg1: i32) -> (i32, i32, i32) {
    %c0_i32 = arith.constant 0 : i32
    %c0_i32_0 = arith.constant 0 : i32
    %c0_i32_1 = arith.constant 0 : i32
    %c0_i32_2 = arith.constant 0 : i32
    return %c0_i32, %c0_i32_0, %c0_i32_1 : i32, i32, i32
  }
  func.func @transform_2(%arg0: i32, %arg1: i32) -> (i32, i32, i32, i32) {
    %c0_i32 = arith.constant 0 : i32
    %c0_i32_0 = arith.constant 0 : i32
    %c0_i32_1 = arith.constant 0 : i32
    return %arg0, %c0_i32, %c0_i32_0, %arg1 : i32, i32, i32, i32
  }
}

</mosaic_0001>

<llo_original>
// kernel: tpu_custom_call.1
$region0: #{tpu_custom_call.1}
  #allocation0 [shape = 'u32[]', space=smem, size = 0x4, offset = 0x4, fixed_abs, tag = 'smem constant byte address 0x4 - core index']
  #allocation1 [shape = 'u32[144,128]{1,0:T(1,128)}', space=vmem, size = 0x12000, scoped, tag = 'internal scratch']
  %s0 = inlined_call_operand.vmem [shape: f32[2,12,128], index: 0, kind: input, shape index: {}]
  %s1 = inlined_call_operand.vmem [shape: f32[2,2,6], index: 1, kind: input, shape index: {}]
  %s2 = inlined_call_operand.hbm [shape: f32[2,2,4,128], index: 2, kind: output, shape index: {}]
  %s3 = sld [smem:[#allocation0]]
  $region41: #{tpu_custom_call.1} parent=0
    _
  %s5 = ssub.s32 1, %s3
  %s6 = scalar_select 0, %s5, %s3
  $region1: #{tpu_custom_call.1} parent=0
    #allocation2 [shape = 'u8[8192]{0}', space=vmem, size = 0x2000, scoped, tag = 'output window, operand 0']
    #allocation3 [shape = 's32[2]{0}', space=sflag, size = 0x8, scoped, tag = 'scoped memory for tpu_custom_call.1']
    %7 = vsyncpa [#allocation3], 0
    %s8 = scalar_lea.sflag [#allocation3], 1
    %9 = vsyncpa %s8, 0
    loop: start=0, step=1, limit=4
    $region2: #{tpu_custom_call.1} parent=1 // loop_pre_header
      _
    $region3: #{tpu_custom_call.1} parent=1 // loop_header
      %s11 = sphi 0, %s15
      %p12 = scmp.ge.s32.totalorder %s11, 4
      %s18 = sphi 0, %s30
      %s19 = sphi 0, %s26
      %s20 = sphi 0, %s18
      %s21 = sphi 0, %s19
      %s22 = sphi 0, %s20
      %s23 = sphi 0, %s21
      %s35 = sphi 0, %s37
      %s38 = sphi 0, %s35
      %s39 = sphi 0, %s38
      %s55 = sphi 0, %s39
      %s59 = sphi 0, %s59
      %s61 = sphi 0, %s59
      %s62 = sphi 0, %s61
      %s76 = sphi 0, %s62
      %s84 = sphi 0, %s86
      %s87 = sphi 0, %s84
      %s88 = sphi 0, %s87
      %s104 = sphi 0, %s88
    $region4: #{tpu_custom_call.1} parent=1 // loop_header_branch
      %14 = sbr.rel (%p12) target = $region8
    $region5: #{tpu_custom_call.1} parent=1 // loop_body
      %s16 = ssub.s32 %s11, 1
      %s17 = ssub.s32 %s11, 2
      %s24 = sadd.s32 1, %s19
      %p25 = scmp.ge.s32.totalorder %s24, 1
      %s26 = scalar_select %p25, 0, %s24
      %s27 = sadd.s32 1, %s18
      %s28 = scalar_select %p25, %s27, %s18
      %p29 = scmp.ge.s32.totalorder %s28, 2
      %s30 = scalar_select %p29, 0, %s28
      %s31 = ssub.s32 %s18, %s30
      %s32 = ssub.s32 %s19, %s26
      %s33 = sor.u32 %s31, %s32
      %p34 = scmp.eq.s32.totalorder %s33, 0
      %s36 = sadd.s32 %s35, 1
      %s37 = scalar_select %p34, %s35, %s36
      %p40 = pneg %p34
      %p41 = scmp.eq.s32.totalorder %s11, 1
      %p42 = por %p40, %p41
      %p43 = scmp.ne.s32.totalorder %s35, %s38
      %p44 = scmp.eq.s32.totalorder %s11, 0
      %p45 = por %p43, %p44
      %p46 = scmp.ne.s32.totalorder %s35, %s38
      %p47 = scmp.eq.s32.totalorder %s16, 1
      %p48 = por %p46, %p47
      %p49 = scmp.ne.s32.totalorder %s38, %s39
      %p50 = scmp.eq.s32.totalorder %s16, 0
      %p51 = por %p49, %p50
      %p52 = scmp.ne.s32.totalorder %s38, %s39
      %p53 = scmp.eq.s32.totalorder %s17, 1
      %p54 = por %p52, %p53
      %p56 = scmp.ne.s32.totalorder %s39, %s55
      %p57 = scmp.eq.s32.totalorder %s17, 0
      %p58 = por %p56, %p57
      %s60 = sadd.s32 %s59, 1
      %p63 = scmp.eq.s32.totalorder %s11, 1
      %p64 = scmp.ne.s32.totalorder %s59, %s61
      %p65 = scmp.eq.s32.totalorder %s11, 0
      %p66 = por %p64, %p65
      %p67 = scmp.ne.s32.totalorder %s59, %s61
      %p68 = scmp.eq.s32.totalorder %s16, 1
      %p69 = por %p67, %p68
      %p70 = scmp.ne.s32.totalorder %s61, %s62
      %p71 = scmp.eq.s32.totalorder %s16, 0
      %p72 = por %p70, %p71
      %p73 = scmp.ne.s32.totalorder %s61, %s62
      %p74 = scmp.eq.s32.totalorder %s17, 1
      %p75 = por %p73, %p74
      %p77 = scmp.ne.s32.totalorder %s62, %s76
      %p78 = scmp.eq.s32.totalorder %s17, 0
      %p79 = por %p77, %p78
      %s80 = ssub.s32 %s18, %s30
      %s81 = ssub.s32 %s19, %s26
      %s82 = sor.u32 %s80, %s81
      %p83 = scmp.eq.s32.totalorder %s82, 0
      %s85 = sadd.s32 %s84, 1
      %s86 = scalar_select %p83, %s84, %s85
      %p89 = pneg %p83
      %p90 = scmp.eq.s32.totalorder %s11, 1
      %p91 = por %p89, %p90
      %p92 = scmp.ne.s32.totalorder %s84, %s87
      %p93 = scmp.eq.s32.totalorder %s11, 0
      %p94 = por %p92, %p93
      %p95 = scmp.ne.s32.totalorder %s84, %s87
      %p96 = scmp.eq.s32.totalorder %s16, 1
      %p97 = por %p95, %p96
      %p98 = scmp.ne.s32.totalorder %s87, %s88
      %p99 = scmp.eq.s32.totalorder %s16, 0
      %p100 = por %p98, %p99
      %p101 = scmp.ne.s32.totalorder %s87, %s88
      %p102 = scmp.eq.s32.totalorder %s17, 1
      %p103 = por %p101, %p102
      %p105 = scmp.ne.s32.totalorder %s88, %s104
      %p106 = scmp.eq.s32.totalorder %s17, 0
      %p107 = por %p105, %p106
      %p108 = scmp.le.s32.totalorder 1, %s11
      %p109 = scmp.lt.s32.totalorder %s11, 3
      %p110 = pnand %p108, %p109
      %p111 = pneg %p110
      // Predicated region
      $region9: #{tpu_custom_call.1} parent=5 // pred_check
        _
      $region10: #{tpu_custom_call.1} parent=5 // pred_check_branch
        %113 = sbr.rel (%p110) target = $region12
      $region11: #{tpu_custom_call.1} parent=5 // pred_region
        %s114 = ssub.s32 %s11, 1
        // Predicated region
        $region13: #{tpu_custom_call.1} parent=11 // pred_check
          %p115 = pneg %p72
        $region14: #{tpu_custom_call.1} parent=11 // pred_check_branch
          %117 = sbr.rel (%p115) target = $region16
        $region15: #{tpu_custom_call.1} parent=11 // pred_region
          _
        $region16: #{tpu_custom_call.1} parent=11 // pred_fallthru
          _
      $region12: #{tpu_custom_call.1} parent=5 // pred_fallthru
        _
      %p118 = scmp.lt.s32.totalorder %s11, 2
      // Predicated region
      $region17: #{tpu_custom_call.1} parent=5 // pred_check
        %p119 = pneg %p118
      $region18: #{tpu_custom_call.1} parent=5 // pred_check_branch
        %121 = sbr.rel (%p119) target = $region20
      $region19: #{tpu_custom_call.1} parent=5 // pred_region
        // Predicated region
        $region21: #{tpu_custom_call.1} parent=19 // pred_check
          %p122 = pneg %p45
        $region22: #{tpu_custom_call.1} parent=19 // pred_check_branch
          %124 = sbr.rel (%p122) target = $region24
        $region23: #{tpu_custom_call.1} parent=19 // pred_region
          %p125 = scmp.lt.s32.totalorder %s18, 1
          %s126 = scalar_select %p125, %s18, 1
          %p127 = scmp.lt.s32.totalorder %s19, 0
          %s128 = scalar_select %p127, %s19, 0
          %s129 = smul.addr %s126, 2
          %s130 = sadd.s32 %s128, %s129
          %s131 = smul.addr %s130, 8
          %s132 = scalar_lea.vmem %s0, %s131
        $region24: #{tpu_custom_call.1} parent=19 // pred_fallthru
          _
      $region20: #{tpu_custom_call.1} parent=5 // pred_fallthru
        _
      %p133 = scmp.le.s32.totalorder 1, %s11
      %p134 = scmp.lt.s32.totalorder %s11, 3
      %p135 = pnand %p133, %p134
      %p136 = pneg %p135
      // Predicated region
      $region25: #{tpu_custom_call.1} parent=5 // pred_check
        _
      $region26: #{tpu_custom_call.1} parent=5 // pred_check_branch
        %138 = sbr.rel (%p135) target = $region28
      $region27: #{tpu_custom_call.1} parent=5 // pred_region
        %s139 = ssub.s32 %s11, 1
        %p140 = scmp.lt.s32.totalorder %s20, 1
        %s141 = scalar_select %p140, %s20, 1
        %p142 = scmp.lt.s32.totalorder %s21, 0
        %s143 = scalar_select %p142, %s21, 0
        %s144 = smul.addr %s141, 2
        %s145 = sadd.s32 %s143, %s144
        %s146 = smul.addr %s145, 8
        %s147 = scalar_lea.vmem %s0, %s146
        %p148 = pneg %p51
        %p149 = pneg %p48
        %p150 = pneg %p72
        %p151 = pneg %p69
        %p152 = pneg %p100
        %p153 = pneg %p97
        %s154 = sand.u32 %s87, 1
        %s155 = scalar_lea.sflag [#allocation3], %s154
        %s156 = sand.u32 %s87, 1
        %s157 = smul.addr %s156, 8
        %s158 = scalar_lea.vmem [#allocation2], %s157
        %p159 = scmp.lt.s32.totalorder %s20, 1
        %s160 = scalar_select %p159, %s20, 1
        %p161 = scmp.lt.s32.totalorder %s21, 0
        %s162 = scalar_select %p161, %s21, 0
        %s163 = smul.addr %s160, 2
        %s164 = sadd.s32 %s162, %s163
        %s165 = smul.addr %s164, 8
        %s166 = scalar_lea.vmem %s0, %s165
        %v167 = vld [vmem:[%s166] sm:$0xf]
        %v168 = vld [vmem:[%s1] sm:$0x3]
        %vm169 = vcmask 31744
        %v171 = vsel %vm169, %v168, 0
        %vm173 = vcmask 1043456
        %v175 = vsel %vm173, %v167, 0
        %177 = vmatprep.subr.mxu0 0.0
        %178 = vmatpush1.msra.mxu0 0.0
        %179 = vmatprep.subr.mxu0 0.0
        %180 = vmatpush1.msra.mxu0 0.0
        %181 = vmatprep.subr.mxu0 0.0
        %182 = vmatpush1.msra.mxu0 0.0
        %183 = vmatprep.subr.mxu0 0.0
        %184 = vmatpush1.msra.mxu0 0.0
        %185 = vmatprep.subr.mxu0 0.0
        %186 = vmatpush1.msra.mxu0 0.0
        %187 = vmatprep.subr.mxu0 0.0
        %188 = vmatpush1.msra.mxu0 0.0
        %189 = vmatprep.subr.mxu0 0.0
        %190 = vmatpush1.msra.mxu0 0.0
        %191 = vmatprep.subr.mxu0 0.0
        %192 = vmatpush1.msra.mxu0 0.0
        %193 = vmatprep.subr.mxu0 0.0
        %194 = vmatpush1.msra.mxu0 0.0
        %195 = vmatprep.subr.mxu0 0.0
        %196 = vmatpush1.msra.mxu0 0.0
        %197 = vmatprep.subr.mxu0 0.0
        %198 = vmatpush1.msra.mxu0 0.0
        %199 = vmatprep.subr.mxu0 0.0
        %200 = vmatpush1.msra.mxu0 0.0
        %201 = vmatprep.subr.mxu0 0.0
        %202 = vmatpush1.msra.mxu0 0.0
        %203 = vmatprep.subr.mxu0 0.0
        %204 = vmatpush1.msra.mxu0 0.0
        %205 = vmatprep.subr.mxu0 0.0
        %206 = vmatpush1.msra.mxu0 0.0
        %207 = vmatprep.subr.mxu0 0.0
        %208 = vmatpush1.msra.mxu0 %v175
        %209 = vmatprep.subr.mxu0 0.0
        %210 = vmatpush2.msra.mxu0 0.0
        %211 = vmatprep.subr.mxu0 0.0
        %212 = vmatpush2.msra.mxu0 0.0
        %213 = vmatprep.subr.mxu0 0.0
        %214 = vmatpush2.msra.mxu0 0.0
        %215 = vmatprep.subr.mxu0 0.0
        %216 = vmatpush2.msra.mxu0 0.0
        %217 = vmatprep.subr.mxu0 0.0
        %218 = vmatpush2.msra.mxu0 0.0
        %219 = vmatprep.subr.mxu0 0.0
        %220 = vmatpush2.msra.mxu0 0.0
        %221 = vmatprep.subr.mxu0 0.0
        %222 = vmatpush2.msra.mxu0 0.0
        %223 = vmatprep.subr.mxu0 0.0
        %224 = vmatpush2.msra.mxu0 0.0
        %225 = vmatprep.subr.mxu0 0.0
        %226 = vmatpush2.msra.mxu0 0.0
        %227 = vmatprep.subr.mxu0 0.0
        %228 = vmatpush2.msra.mxu0 0.0
        %229 = vmatprep.subr.mxu0 0.0
        %230 = vmatpush2.msra.mxu0 0.0
        %231 = vmatprep.subr.mxu0 0.0
        %232 = vmatpush2.msra.mxu0 0.0
        %233 = vmatprep.subr.mxu0 0.0
        %234 = vmatpush2.msra.mxu0 0.0
        %235 = vmatprep.subr.mxu0 0.0
        %236 = vmatpush2.msra.mxu0 0.0
        %237 = vmatprep.subr.mxu0 0.0
        %238 = vmatpush2.msra.mxu0 0.0
        %239 = vmatprep.subr.mxu0 0.0
        %240 = vmatpush2.msra.mxu0 0.0
        %241 = vmatprep.mubr.f32.mxu0 0.0
        %242 = vmatmul.mubr.f32.gmra.mxu0 %v171
        %v243 = vpop.f32.mrf.mxu0
        %v244 = vadd.f32 0.0, %v243
        %v245 = vpop.f32.mrf.mxu0
        %246 = vdwg.mxu0
        %247 = vst [vmem:[%s158] sm:$0x3] %v244
        %v248 = vld [vmem:[%s166 + $0x6] sm:$0xf]
        %s249 = scalar_lea.vmem %s1, 2
        %v250 = vld [vmem:[%s249] sm:$0x3]
        %v252 = vsel %vm169, %v250, 0
        %v255 = vsel %vm173, %v248, 0
        %257 = vmatprep.subr.mxu0 0.0
        %258 = vmatpush1.msra.mxu0 0.0
        %259 = vmatprep.subr.mxu0 0.0
        %260 = vmatpush1.msra.mxu0 0.0
        %261 = vmatprep.subr.mxu0 0.0
        %262 = vmatpush1.msra.mxu0 0.0
        %263 = vmatprep.subr.mxu0 0.0
        %264 = vmatpush1.msra.mxu0 0.0
        %265 = vmatprep.subr.mxu0 0.0
        %266 = vmatpush1.msra.mxu0 0.0
        %267 = vmatprep.subr.mxu0 0.0
        %268 = vmatpush1.msra.mxu0 0.0
        %269 = vmatprep.subr.mxu0 0.0
        %270 = vmatpush1.msra.mxu0 0.0
        %271 = vmatprep.subr.mxu0 0.0
        %272 = vmatpush1.msra.mxu0 0.0
        %273 = vmatprep.subr.mxu0 0.0
        %274 = vmatpush1.msra.mxu0 0.0
        %275 = vmatprep.subr.mxu0 0.0
        %276 = vmatpush1.msra.mxu0 0.0
        %277 = vmatprep.subr.mxu0 0.0
        %278 = vmatpush1.msra.mxu0 0.0
        %279 = vmatprep.subr.mxu0 0.0
        %280 = vmatpush1.msra.mxu0 0.0
        %281 = vmatprep.subr.mxu0 0.0
        %282 = vmatpush1.msra.mxu0 0.0
        %283 = vmatprep.subr.mxu0 0.0
        %284 = vmatpush1.msra.mxu0 0.0
        %285 = vmatprep.subr.mxu0 0.0
        %286 = vmatpush1.msra.mxu0 0.0
        %287 = vmatprep.subr.mxu0 0.0
        %288 = vmatpush1.msra.mxu0 %v255
        %289 = vmatprep.subr.mxu0 0.0
        %290 = vmatpush2.msra.mxu0 0.0
        %291 = vmatprep.subr.mxu0 0.0
        %292 = vmatpush2.msra.mxu0 0.0
        %293 = vmatprep.subr.mxu0 0.0
        %294 = vmatpush2.msra.mxu0 0.0
        %295 = vmatprep.subr.mxu0 0.0
        %296 = vmatpush2.msra.mxu0 0.0
        %297 = vmatprep.subr.mxu0 0.0
        %298 = vmatpush2.msra.mxu0 0.0
        %299 = vmatprep.subr.mxu0 0.0
        %300 = vmatpush2.msra.mxu0 0.0
        %301 = vmatprep.subr.mxu0 0.0
        %302 = vmatpush2.msra.mxu0 0.0
        %303 = vmatprep.subr.mxu0 0.0
        %304 = vmatpush2.msra.mxu0 0.0
        %305 = vmatprep.subr.mxu0 0.0
        %306 = vmatpush2.msra.mxu0 0.0
        %307 = vmatprep.subr.mxu0 0.0
        %308 = vmatpush2.msra.mxu0 0.0
        %309 = vmatprep.subr.mxu0 0.0
        %310 = vmatpush2.msra.mxu0 0.0
        %311 = vmatprep.subr.mxu0 0.0
        %312 = vmatpush2.msra.mxu0 0.0
        %313 = vmatprep.subr.mxu0 0.0
        %314 = vmatpush2.msra.mxu0 0.0
        %315 = vmatprep.subr.mxu0 0.0
        %316 = vmatpush2.msra.mxu0 0.0
        %317 = vmatprep.subr.mxu0 0.0
        %318 = vmatpush2.msra.mxu0 0.0
        %319 = vmatprep.subr.mxu0 0.0
        %320 = vmatpush2.msra.mxu0 0.0
        %321 = vmatprep.mubr.f32.mxu0 0.0
        %322 = vmatmul.mubr.f32.gmra.mxu0 %v252
        %v323 = vpop.f32.mrf.mxu0
        %v324 = vadd.f32 0.0, %v323
        %v325 = vpop.f32.mrf.mxu0
        %326 = vdwg.mxu0
        %327 = vst [vmem:[%s158 + $0x2] sm:$0x3] %v324
        %v328 = vld [vmem:[%s166 + $0x4] sm:$0x3]
        %v329 = vld [vmem:[%s1] sm:$0x3]
        %331 = vrot.lane.b32.xlu0 %v329, 124
        %v332 = vpop.permute.xlu0 %331
        %vm333 = vcmask 15360
        %v334 = vsel %vm333, %v332, 0
        %vm336 = vcmask 1041408
        %v338 = vsel %vm336, %v328, 0
        %340 = vmatprep.subr.mxu0 0.0
        %341 = vmatpush1.msra.mxu0 0.0
        %342 = vmatprep.subr.mxu0 0.0
        %343 = vmatpush1.msra.mxu0 0.0
        %344 = vmatprep.subr.mxu0 0.0
        %345 = vmatpush1.msra.mxu0 0.0
        %346 = vmatprep.subr.mxu0 0.0
        %347 = vmatpush1.msra.mxu0 0.0
        %348 = vmatprep.subr.mxu0 0.0
        %349 = vmatpush1.msra.mxu0 0.0
        %350 = vmatprep.subr.mxu0 0.0
        %351 = vmatpush1.msra.mxu0 0.0
        %352 = vmatprep.subr.mxu0 0.0
        %353 = vmatpush1.msra.mxu0 0.0
        %354 = vmatprep.subr.mxu0 0.0
        %355 = vmatpush1.msra.mxu0 0.0
        %356 = vmatprep.subr.mxu0 0.0
        %357 = vmatpush1.msra.mxu0 0.0
        %358 = vmatprep.subr.mxu0 0.0
        %359 = vmatpush1.msra.mxu0 0.0
        %360 = vmatprep.subr.mxu0 0.0
        %361 = vmatpush1.msra.mxu0 0.0
        %362 = vmatprep.subr.mxu0 0.0
        %363 = vmatpush1.msra.mxu0 0.0
        %364 = vmatprep.subr.mxu0 0.0
        %365 = vmatpush1.msra.mxu0 0.0
        %366 = vmatprep.subr.mxu0 0.0
        %367 = vmatpush1.msra.mxu0 0.0
        %368 = vmatprep.subr.mxu0 0.0
        %369 = vmatpush1.msra.mxu0 0.0
        %370 = vmatprep.subr.mxu0 0.0
        %371 = vmatpush1.msra.mxu0 %v338
        %372 = vmatprep.subr.mxu0 0.0
        %373 = vmatpush2.msra.mxu0 0.0
        %374 = vmatprep.subr.mxu0 0.0
        %375 = vmatpush2.msra.mxu0 0.0
        %376 = vmatprep.subr.mxu0 0.0
        %377 = vmatpush2.msra.mxu0 0.0
        %378 = vmatprep.subr.mxu0 0.0
        %379 = vmatpush2.msra.mxu0 0.0
        %380 = vmatprep.subr.mxu0 0.0
        %381 = vmatpush2.msra.mxu0 0.0
        %382 = vmatprep.subr.mxu0 0.0
        %383 = vmatpush2.msra.mxu0 0.0
        %384 = vmatprep.subr.mxu0 0.0
        %385 = vmatpush2.msra.mxu0 0.0
        %386 = vmatprep.subr.mxu0 0.0
        %387 = vmatpush2.msra.mxu0 0.0
        %388 = vmatprep.subr.mxu0 0.0
        %389 = vmatpush2.msra.mxu0 0.0
        %390 = vmatprep.subr.mxu0 0.0
        %391 = vmatpush2.msra.mxu0 0.0
        %392 = vmatprep.subr.mxu0 0.0
        %393 = vmatpush2.msra.mxu0 0.0
        %394 = vmatprep.subr.mxu0 0.0
        %395 = vmatpush2.msra.mxu0 0.0
        %396 = vmatprep.subr.mxu0 0.0
        %397 = vmatpush2.msra.mxu0 0.0
        %398 = vmatprep.subr.mxu0 0.0
        %399 = vmatpush2.msra.mxu0 0.0
        %400 = vmatprep.subr.mxu0 0.0
        %401 = vmatpush2.msra.mxu0 0.0
        %402 = vmatprep.subr.mxu0 0.0
        %403 = vmatpush2.msra.mxu0 0.0
        %404 = vmatprep.mubr.f32.mxu0 0.0
        %405 = vmatmul.mubr.f32.gmra.mxu0 %v334
        %v406 = vpop.f32.mrf.mxu0
        %v407 = vadd.f32 0.0, %v406
        %v408 = vpop.f32.mrf.mxu0
        %409 = vdwg.mxu0
        %s410 = scalar_lea.vmem %s158, 4 [#allocation2]
        %411 = vst [vmem:[%s410] sm:$0x3] %v407
        %v412 = vld [vmem:[%s166 + $0xa] sm:$0x3]
        %v413 = vld [vmem:[%s249] sm:$0x3]
        %415 = vrot.lane.b32.xlu0 %v413, 124
        %v416 = vpop.permute.xlu0 %415
        %v417 = vsel %vm333, %v416, 0
        %v420 = vsel %vm336, %v412, 0
        %422 = vmatprep.subr.mxu0 0.0
        %423 = vmatpush1.msra.mxu0 0.0
        %424 = vmatprep.subr.mxu0 0.0
        %425 = vmatpush1.msra.mxu0 0.0
        %426 = vmatprep.subr.mxu0 0.0
        %427 = vmatpush1.msra.mxu0 0.0
        %428 = vmatprep.subr.mxu0 0.0
        %429 = vmatpush1.msra.mxu0 0.0
        %430 = vmatprep.subr.mxu0 0.0
        %431 = vmatpush1.msra.mxu0 0.0
        %432 = vmatprep.subr.mxu0 0.0
        %433 = vmatpush1.msra.mxu0 0.0
        %434 = vmatprep.subr.mxu0 0.0
        %435 = vmatpush1.msra.mxu0 0.0
        %436 = vmatprep.subr.mxu0 0.0
        %437 = vmatpush1.msra.mxu0 0.0
        %438 = vmatprep.subr.mxu0 0.0
        %439 = vmatpush1.msra.mxu0 0.0
        %440 = vmatprep.subr.mxu0 0.0
        %441 = vmatpush1.msra.mxu0 0.0
        %442 = vmatprep.subr.mxu0 0.0
        %443 = vmatpush1.msra.mxu0 0.0
        %444 = vmatprep.subr.mxu0 0.0
        %445 = vmatpush1.msra.mxu0 0.0
        %446 = vmatprep.subr.mxu0 0.0
        %447 = vmatpush1.msra.mxu0 0.0
        %448 = vmatprep.subr.mxu0 0.0
        %449 = vmatpush1.msra.mxu0 0.0
        %450 = vmatprep.subr.mxu0 0.0
        %451 = vmatpush1.msra.mxu0 0.0
        %452 = vmatprep.subr.mxu0 0.0
        %453 = vmatpush1.msra.mxu0 %v420
        %454 = vmatprep.subr.mxu0 0.0
        %455 = vmatpush2.msra.mxu0 0.0
        %456 = vmatprep.subr.mxu0 0.0
        %457 = vmatpush2.msra.mxu0 0.0
        %458 = vmatprep.subr.mxu0 0.0
        %459 = vmatpush2.msra.mxu0 0.0
        %460 = vmatprep.subr.mxu0 0.0
        %461 = vmatpush2.msra.mxu0 0.0
        %462 = vmatprep.subr.mxu0 0.0
        %463 = vmatpush2.msra.mxu0 0.0
        %464 = vmatprep.subr.mxu0 0.0
        %465 = vmatpush2.msra.mxu0 0.0
        %466 = vmatprep.subr.mxu0 0.0
        %467 = vmatpush2.msra.mxu0 0.0
        %468 = vmatprep.subr.mxu0 0.0
        %469 = vmatpush2.msra.mxu0 0.0
        %470 = vmatprep.subr.mxu0 0.0
        %471 = vmatpush2.msra.mxu0 0.0
        %472 = vmatprep.subr.mxu0 0.0
        %473 = vmatpush2.msra.mxu0 0.0
        %474 = vmatprep.subr.mxu0 0.0
        %475 = vmatpush2.msra.mxu0 0.0
        %476 = vmatprep.subr.mxu0 0.0
        %477 = vmatpush2.msra.mxu0 0.0
        %478 = vmatprep.subr.mxu0 0.0
        %479 = vmatpush2.msra.mxu0 0.0
        %480 = vmatprep.subr.mxu0 0.0
        %481 = vmatpush2.msra.mxu0 0.0
        %482 = vmatprep.subr.mxu0 0.0
        %483 = vmatpush2.msra.mxu0 0.0
        %484 = vmatprep.subr.mxu0 0.0
        %485 = vmatpush2.msra.mxu0 0.0
        %486 = vmatprep.mubr.f32.mxu0 0.0
        %487 = vmatmul.mubr.f32.gmra.mxu0 %v417
        %v488 = vpop.f32.mrf.mxu0
        %v489 = vadd.f32 0.0, %v488
        %v490 = vpop.f32.mrf.mxu0
        %491 = vdwg.mxu0
        %492 = vst [vmem:[%s410 + $0x2] sm:$0x3] %v489
        %s493 = sand.u32 %s87, 1
        %s494 = scalar_lea.sflag [#allocation3], %s493
        %s495 = sand.u32 %s87, 1
        %s496 = smul.addr %s495, 8
        %s497 = scalar_lea.vmem [#allocation2], %s496
        // Predicated region
        $region29: #{tpu_custom_call.1} parent=27 // pred_check
          %p498 = pneg %p97
        $region30: #{tpu_custom_call.1} parent=27 // pred_check_branch
          %500 = sbr.rel (%p498) target = $region32
        $region31: #{tpu_custom_call.1} parent=27 // pred_region
          %s502 = ssub.s32 128, 128
          %503 = vsyncadd %s494, %s502
          %s504 = smul.addr %s20, 2
          %s505 = sadd.s32 %s21, %s504
          %s506 = smul.addr %s505, 64
          %s507 = scalar_lea.hbm %s2, %s506
          %s508 = sshll.u32 %s497, 4
          %s509 = int_to_ptr.vmem [resolvable:$true] %s508
          %514 = dma.vmem_to_hbm [thread:$0]  %s509, 128, %s507, %s494, 64, 64, 4
        $region32: #{tpu_custom_call.1} parent=27 // pred_fallthru
          _
      $region28: #{tpu_custom_call.1} parent=5 // pred_fallthru
        _
      %p515 = scmp.le.s32.totalorder 2, %s11
      // Predicated region
      $region33: #{tpu_custom_call.1} parent=5 // pred_check
        %p516 = pneg %p515
      $region34: #{tpu_custom_call.1} parent=5 // pred_check_branch
        %518 = sbr.rel (%p516) target = $region36
      $region35: #{tpu_custom_call.1} parent=5 // pred_region
        %s519 = ssub.s32 %s11, 2
        // Predicated region
        $region37: #{tpu_custom_call.1} parent=35 // pred_check
          %p520 = pneg %p103
        $region38: #{tpu_custom_call.1} parent=35 // pred_check_branch
          %522 = sbr.rel (%p520) target = $region40
        $region39: #{tpu_custom_call.1} parent=35 // pred_region
          %s523 = sand.u32 %s88, 1
          %s524 = scalar_lea.sflag [#allocation3], %s523
          %s525 = sand.u32 %s88, 1
          %s526 = smul.addr %s525, 8
          %s527 = scalar_lea.vmem [#allocation2], %s526
          %528 = dma.done %s524, 128
        $region40: #{tpu_custom_call.1} parent=35 // pred_fallthru
          _
      $region36: #{tpu_custom_call.1} parent=5 // pred_fallthru
        _
    $region6: #{tpu_custom_call.1} parent=1 // loop_footer
      %s15 = sadd.s32 1, %s11
    $region7: #{tpu_custom_call.1} parent=1 // loop_footer_branch
      %10 = sbr.rel target = $region3
    $region8: #{tpu_custom_call.1} parent=1 // loop_exit
      _
    %529 = vsyncpa [#allocation3], 1
    %s530 = scalar_lea.sflag [#allocation3], 1
    %531 = vsyncpa %s530, 1

</llo_original>
